<compile_context>
chip_gen: v7x
topology: tpu7x:2x2x1
jax: 0.10.0
libtpu: 0.0.40
codegen_flags: <defaults>
</compile_context>

<pallas_src>
import functools
import math

import jax
import jax.numpy as jnp
from jax import lax
from jax.experimental import pallas as pl
from jax.experimental.pallas import tpu as pltpu

LN_EPS = 1e-5
_INV_SQRT2 = 1.0 / math.sqrt(2.0)


def _round_up(x, m):
    return -(-x // m) * m


def _actdropnorm_kernel(x_ref, gamma_ref, beta_ref, o_ref, *, out_mode,
                        approximate_gelu):
    # x_ref:     (F, tile_T)  input block, original NCL layout (T on lanes)
    # gamma_ref: (F, 1)       LayerNorm scale, f32 (resident constant block)
    # beta_ref:  (F, 1)       LayerNorm shift, f32
    # o_ref:     (F, tile_T)           if out_mode == "keep"
    #            (tile_T, F)           if out_mode == "transpose"
    #            (tile_T*F//128, 128)  if out_mode == "flat"
    x = x_ref[...].astype(jnp.float32)
    inv_f = jnp.float32(1.0 / x.shape[0])

    # LayerNorm over the feature (sublane) axis.  One-pass moments: both
    # reductions run on the XLU concurrently; rsqrt goes to the EUP slot.
    s1 = jnp.sum(x, axis=0, keepdims=True)
    s2 = jnp.sum(x * x, axis=0, keepdims=True)
    mean = s1 * inv_f
    var = jnp.maximum(s2 * inv_f - mean * mean, 0.0)
    x_hat = (x - mean) * lax.rsqrt(var + jnp.float32(LN_EPS))
    y = x_hat * gamma_ref[...] + beta_ref[...]

    if approximate_gelu:
        # tanh approximation (EUP tanh) -- opt-in; NOT bit-identical to nn.GELU().
        g = jax.nn.gelu(y, approximate=True)
    else:
        # Exact erf GELU (nn.GELU default): 0.5*y*(1 + erf(y/sqrt(2))).
        g = 0.5 * y * (1.0 + lax.erf(y * jnp.float32(_INV_SQRT2)))

    # TODO(synk): nn.Dropout is identity in eval mode; training-mode dropout
    # (pltpu.prng_seed + pltpu.prng_random_bits mask, scaled by 1/(1-p)) is not
    # implemented since PyTorch's RNG stream cannot be reproduced anyway.

    # Cast to the output dtype BEFORE the transpose: halves the data pushed
    # through the XLU (and vreg pressure) for bf16 outputs.
    g = g.astype(o_ref.dtype)
    if out_mode == "keep":
        o_ref[...] = g
    else:
        gt = jnp.transpose(g, (1, 0))  # XLU minor-dim swap (== pltpu.einshape "ft->tf")
        if out_mode == "transpose":
            o_ref[...] = gt
        else:  # "flat": lane-dense store, (tile_T, F) -> (tile_T*F//128, 128)
            o_ref[...] = gt.reshape(o_ref.shape)


def _default_block_bytes():
    # ~4 MiB blocks sit on the measured ~85% HBM-roofline plateau and are safe
    # for v7x's 64 MiB VMEM; on v5e/v6e (128 MiB VMEM) use slightly larger
    # blocks to further amortize the ~0.35us per-grid-step overhead.
    try:
        vmem = pltpu.get_tpu_info().vmem_capacity_bytes
    except Exception:
        vmem = 0
    return (6 << 20) if vmem >= (100 << 20) else (4 << 20)


def _choose_time_tile(B, T, F, in_itemsize, out_itemsize, out_lane_padded,
                      align128, target_block_bytes):
    """Largest time tile such that one block is ~target_block_bytes of VMEM."""
    in_col = F * in_itemsize
    out_col = (_round_up(F, 128) if out_lane_padded else F) * out_itemsize
    cap = max(128, (target_block_bytes // max(in_col, out_col)) // 128 * 128)
    if align128:
        # Fused-transpose path: keep the transpose source a multiple of 128
        # lanes (caller guarantees T >= 128); ragged last block covers the tail.
        tile = min(cap, max(128, (T // 128) * 128))
    else:
        tile = T if T <= cap else cap
    # v7x megacore: guarantee >= 2 parallel grid steps when possible
    # (minimum legal granularity along T is 128 lanes).
    if B == 1 and tile >= T and T >= 256:
        tile = _round_up(-(-T // 2), 128)
    return tile


@functools.partial(
    jax.jit, static_argnames=("keep_shape", "approximate_gelu", "lane_dense_out"))
def act_drop_norm_cnn1d(t, gamma, beta, *, keep_shape=False,
                        approximate_gelu=False, lane_dense_out=False):
    """t: (B, n_feats, T). Returns (B, T, n_feats), or (B, n_feats, T) if keep_shape."""
    B, F, T = t.shape
    in_itemsize = jnp.dtype(t.dtype).itemsize
    out_itemsize = in_itemsize

    if keep_shape:
        out_mode = "keep"
    else:
        sub = 128 // F if (128 % F == 0 and F >= 8) else 0
        if lane_dense_out and sub > 0 and T >= 128 and T % sub == 0:
            out_mode = "flat"
        else:
            out_mode = "transpose"

    # Only tiny inputs (T < 128) still pad (negligible); everything else uses a
    # ragged last block, i.e. no extra HBM pad/slice pass.
    needs_pad = (out_mode != "keep") and (T < 128)
    T_k = 128 if needs_pad else T
    x_in = jnp.pad(t, ((0, 0), (0, 0), (0, T_k - T))) if needs_pad else t

    tile_T = _choose_time_tile(
        B, T_k, F, in_itemsize, out_itemsize,
        out_lane_padded=(out_mode == "transpose" and F % 128 != 0),
        align128=(out_mode != "keep"),
        target_block_bytes=_default_block_bytes())
    grid = (B, pl.cdiv(T_k, tile_T))

    # LayerNorm affine params stay in f32 (tiny resident VMEM blocks): no bf16
    # round-trip, matches PyTorch's f32 parameters.
    gamma2 = gamma.reshape(F, 1).astype(jnp.float32)
    beta2 = beta.reshape(F, 1).astype(jnp.float32)

    in_specs = [
        pl.BlockSpec((None, F, tile_T), lambda b, tt: (b, 0, tt)),
        pl.BlockSpec((F, 1), lambda b, tt: (0, 0)),
        pl.BlockSpec((F, 1), lambda b, tt: (0, 0)),
    ]
    if out_mode == "keep":
        out_shape = jax.ShapeDtypeStruct((B, F, T_k), t.dtype)
        out_spec = pl.BlockSpec((None, F, tile_T), lambda b, tt: (b, 0, tt))
        out_block_vmem = F * tile_T * out_itemsize
    elif out_mode == "transpose":
        out_shape = jax.ShapeDtypeStruct((B, T_k, F), t.dtype)
        out_spec = pl.BlockSpec((None, tile_T, F), lambda b, tt: (b, tt, 0))
        out_block_vmem = _round_up(F, 128) * tile_T * out_itemsize  # lane padding
    else:  # "flat": free reinterpretation of (B, T, F) as (B, T*F/128, 128)
        sub = 128 // F
        out_shape = jax.ShapeDtypeStruct((B, T_k // sub, 128), t.dtype)
        out_spec = pl.BlockSpec((None, tile_T // sub, 128), lambda b, tt: (b, tt, 0))
        out_block_vmem = F * tile_T * out_itemsize

    # VMEM budget: double-buffered in/out blocks + ~3 block-sized f32 temps,
    # with ~1.5x headroom.  Stays well under v7x's 64 MiB physical VMEM and
    # lifts v5e's 16 MiB scoped default.
    in_block_vmem = F * tile_T * in_itemsize
    est = 2 * in_block_vmem + 2 * out_block_vmem + 3 * F * tile_T * 4 + (1 << 20)
    vmem_limit = int(min(max(est + est // 2, 24 << 20), 56 << 20))

    out = pl.pallas_call(
        functools.partial(_actdropnorm_kernel, out_mode=out_mode,
                          approximate_gelu=approximate_gelu),
        out_shape=out_shape,
        grid_spec=pltpu.PrefetchScalarGridSpec(
            num_scalar_prefetch=0,
            grid=grid,
            in_specs=in_specs,
            out_specs=out_spec,
        ),
        compiler_params=pltpu.CompilerParams(
            dimension_semantics=("parallel", "parallel"),
            vmem_limit_bytes=vmem_limit,
        ),
    )(x_in, gamma2, beta2)

    if out_mode == "flat":
        out = out.reshape(B, T_k, F)   # same HBM layout -> free view
    if out_mode != "keep" and needs_pad:
        out = out[:, :T, :]            # only for tiny T (< 128)
    return out


def _reference(t, gamma, beta, keep_shape=False):
    # Pure-JAX reference mirroring the PyTorch forward (eval mode).
    x = jnp.transpose(t, (0, 2, 1)).astype(jnp.float32)
    mean = jnp.mean(x, axis=-1, keepdims=True)
    var = jnp.mean((x - mean) ** 2, axis=-1, keepdims=True)
    y = (x - mean) * lax.rsqrt(var + LN_EPS) * gamma + beta
    g = 0.5 * y * (1.0 + lax.erf(y * jnp.float32(_INV_SQRT2)))
    if keep_shape:
        g = jnp.transpose(g, (0, 2, 1))
    return g.astype(t.dtype)


if __name__ == "__main__":
    # Small shapes: batch=2, n_feats=32, time=128 (NCL input, as after Conv1d).
    B, n_feats, T = 2, 32, 128

    key = jax.random.PRNGKey(0)
    k_x, k_g, k_b = jax.random.split(key, 3)

    x = jax.random.normal(k_x, (B, n_feats, T), dtype=jnp.float32)
    gamma = 1.0 + 0.05 * jax.random.normal(k_g, (n_feats,), dtype=jnp.float32)
    beta = 0.05 * jax.random.normal(k_b, (n_feats,), dtype=jnp.float32)

    # keep_shape=False: fused in-kernel transpose, output (B, T, F).
    out = act_drop_norm_cnn1d(x, gamma, beta, keep_shape=False)
    jax.block_until_ready(out)
    ref = _reference(x, gamma, beta, keep_shape=False)
    assert out.shape == (B, T, n_feats)
    assert jnp.allclose(out, ref, atol=1e-5, rtol=1e-5), "mismatch vs reference"

    # keep_shape=True: (B, F, T) in and out, zero transposes anywhere.
    out_ks = act_drop_norm_cnn1d(x, gamma, beta, keep_shape=True)
    jax.block_until_ready(out_ks)
    ref_ks = _reference(x, gamma, beta, keep_shape=True)
    assert out_ks.shape == (B, n_feats, T)
    assert jnp.allclose(out_ks, ref_ks, atol=1e-5, rtol=1e-5), "mismatch (keep_shape)"

    # B=1 with unaligned T: exercises the ragged last block (no pad/slice HBM
    # passes) and the >=2-step megacore-friendly grid.
    T3 = 300
    x3 = jax.random.normal(k_g, (1, n_feats, T3), dtype=jnp.float32)
    out3 = act_drop_norm_cnn1d(x3, gamma, beta, keep_shape=False)
    jax.block_until_ready(out3)
    ref3 = _reference(x3, gamma, beta, keep_shape=False)
    assert out3.shape == (1, T3, n_feats)
    assert jnp.allclose(out3, ref3, atol=1e-5, rtol=1e-5), "mismatch (ragged T)"

    # Tiny T (< 128): the only remaining padded case (negligible size).
    T4 = 16
    x4 = jax.random.normal(k_b, (B, n_feats, T4), dtype=jnp.float32)
    out4 = act_drop_norm_cnn1d(x4, gamma, beta, keep_shape=False)
    jax.block_until_ready(out4)
    ref4 = _reference(x4, gamma, beta, keep_shape=False)
    assert out4.shape == (B, T4, n_feats)
    assert jnp.allclose(out4, ref4, atol=1e-5, rtol=1e-5), "mismatch (short T)"

    print("KERNEL_OK")
</pallas_src>

<mosaic_0001>
module attributes {stable_mosaic.version = 11 : i64} {
  func.func @_actdropnorm_kernel(%arg0: i32, %arg1: i32, %arg2: memref<1x32x128xf32, #tpu.memory_space<vmem>>, %arg3: memref<32x1xf32, #tpu.memory_space<vmem>>, %arg4: memref<32x1xf32, #tpu.memory_space<vmem>>, %arg5: memref<1x128x32xf32, #tpu.memory_space<vmem>>) attributes {dimension_semantics = [#tpu.dimension_semantics<parallel>, #tpu.dimension_semantics<parallel>], iteration_bounds = array<i64: 2, 1>, scalar_prefetch = 0 : i64, scratch_operands = 0 : i64, tpu.core_type = #tpu.core_type<tc>, window_params = [{transform_indices = @transform_0, window_bounds = array<i64: 1, 32, 128>}, {pipeline_mode = #tpu.pipeline_mode<synchronous>, transform_indices = @transform_1, window_bounds = array<i64: 32, 1>}, {pipeline_mode = #tpu.pipeline_mode<synchronous>, transform_indices = @transform_2, window_bounds = array<i64: 32, 1>}, {transform_indices = @transform_3, window_bounds = array<i64: 1, 128, 32>}]} {
    %c0 = arith.constant 0 : index
    %c0_0 = arith.constant 0 : index
    %c0_1 = arith.constant 0 : index
    %0 = vector.load %arg2[%c0, %c0_0, %c0_1] : memref<1x32x128xf32, #tpu.memory_space<vmem>>, vector<1x32x128xf32>
    %1 = vector.shape_cast %0 : vector<1x32x128xf32> to vector<32x128xf32>
    %cst = arith.constant dense<0.000000e+00> : vector<128xf32>
    %2 = vector.multi_reduction <add>, %1, %cst [0] : vector<32x128xf32> to vector<128xf32>
    %3 = vector.shape_cast %2 : vector<128xf32> to vector<1x128xf32>
    %4 = arith.mulf %1, %1 : vector<32x128xf32>
    %cst_2 = arith.constant dense<0.000000e+00> : vector<128xf32>
    %5 = vector.multi_reduction <add>, %4, %cst_2 [0] : vector<32x128xf32> to vector<128xf32>
    %6 = vector.shape_cast %5 : vector<128xf32> to vector<1x128xf32>
    %cst_3 = arith.constant 3.125000e-02 : f32
    %7 = vector.broadcast %cst_3 : f32 to vector<1x128xf32>
    %8 = arith.mulf %3, %7 : vector<1x128xf32>
    %cst_4 = arith.constant 3.125000e-02 : f32
    %9 = vector.broadcast %cst_4 : f32 to vector<1x128xf32>
    %10 = arith.mulf %6, %9 : vector<1x128xf32>
    %11 = arith.mulf %8, %8 : vector<1x128xf32>
    %12 = arith.subf %10, %11 : vector<1x128xf32>
    %cst_5 = arith.constant 0.000000e+00 : f32
    %13 = vector.broadcast %cst_5 : f32 to vector<1x128xf32>
    %14 = arith.maximumf %12, %13 : vector<1x128xf32>
    %15 = vector.broadcast %8 : vector<1x128xf32> to vector<32x128xf32>
    %16 = arith.subf %1, %15 : vector<32x128xf32>
    %cst_6 = arith.constant 9.99999974E-6 : f32
    %17 = vector.broadcast %cst_6 : f32 to vector<1x128xf32>
    %18 = arith.addf %14, %17 : vector<1x128xf32>
    %19 = math.rsqrt %18 : vector<1x128xf32>
    %20 = vector.broadcast %19 : vector<1x128xf32> to vector<32x128xf32>
    %21 = arith.mulf %16, %20 : vector<32x128xf32>
    %c0_7 = arith.constant 0 : index
    %c0_8 = arith.constant 0 : index
    %22 = vector.load %arg3[%c0_7, %c0_8] : memref<32x1xf32, #tpu.memory_space<vmem>>, vector<32x1xf32>
    %23 = vector.broadcast %22 : vector<32x1xf32> to vector<32x128xf32>
    %24 = arith.mulf %21, %23 : vector<32x128xf32>
    %c0_9 = arith.constant 0 : index
    %c0_10 = arith.constant 0 : index
    %25 = vector.load %arg4[%c0_9, %c0_10] : memref<32x1xf32, #tpu.memory_space<vmem>>, vector<32x1xf32>
    %26 = vector.broadcast %25 : vector<32x1xf32> to vector<32x128xf32>
    %27 = arith.addf %24, %26 : vector<32x128xf32>
    %cst_11 = arith.constant 5.000000e-01 : f32
    %28 = vector.broadcast %cst_11 : f32 to vector<32x128xf32>
    %29 = arith.mulf %28, %27 : vector<32x128xf32>
    %cst_12 = arith.constant 0.707106769 : f32
    %30 = vector.broadcast %cst_12 : f32 to vector<32x128xf32>
    %31 = arith.mulf %27, %30 : vector<32x128xf32>
    %32 = math.erf %31 : vector<32x128xf32>
    %cst_13 = arith.constant 1.000000e+00 : f32
    %33 = vector.broadcast %cst_13 : f32 to vector<32x128xf32>
    %34 = arith.addf %33, %32 : vector<32x128xf32>
    %35 = arith.mulf %29, %34 : vector<32x128xf32>
    %36 = tpu.transpose %35, [1, 0] : vector<32x128xf32> -> vector<128x32xf32>
    %c0_14 = arith.constant 0 : index
    %c0_15 = arith.constant 0 : index
    %c0_16 = arith.constant 0 : index
    %37 = vector.load %arg5[%c0_14, %c0_15, %c0_16] : memref<1x128x32xf32, #tpu.memory_space<vmem>>, vector<1x128x32xf32>
    %38 = vector.shape_cast %37 : vector<1x128x32xf32> to vector<128x32xf32>
    %39 = vector.shape_cast %36 : vector<128x32xf32> to vector<1x128x32xf32>
    tpu.vector_store %arg5[%c0_14, %c0_15, %c0_16], %39 {strides = array<i32>} : memref<1x128x32xf32, #tpu.memory_space<vmem>>, vector<1x128x32xf32>,
    return
  }
  func.func @transform_0(%arg0: i32, %arg1: i32) -> (i32, i32, i32) {
    %c0_i32 = arith.constant 0 : i32
    %c0_i32_0 = arith.constant 0 : i32
    return %arg0, %c0_i32, %arg1 : i32, i32, i32
  }
  func.func @transform_1(%arg0: i32, %arg1: i32) -> (i32, i32) {
    %c0_i32 = arith.constant 0 : i32
    %c0_i32_0 = arith.constant 0 : i32
    %c0_i32_1 = arith.constant 0 : i32
    return %c0_i32, %c0_i32_0 : i32, i32
  }
  func.func @transform_2(%arg0: i32, %arg1: i32) -> (i32, i32) {
    %c0_i32 = arith.constant 0 : i32
    %c0_i32_0 = arith.constant 0 : i32
    %c0_i32_1 = arith.constant 0 : i32
    return %c0_i32, %c0_i32_0 : i32, i32
  }
  func.func @transform_3(%arg0: i32, %arg1: i32) -> (i32, i32, i32) {
    %c0_i32 = arith.constant 0 : i32
    %c0_i32_0 = arith.constant 0 : i32
    return %arg0, %arg1, %c0_i32 : i32, i32, i32
  }
}

</mosaic_0001>

<llo_original>
// kernel: act_drop_norm_cnn1d.1
$region0: #{act_drop_norm_cnn1d.1}
  #allocation0 [shape = 'u32[]', space=smem, size = 0x4, offset = 0x4, fixed_abs, tag = 'smem constant byte address 0x4 - core index']
  #allocation1 [shape = 'u32[144,128]{1,0:T(1,128)}', space=vmem, size = 0x12000, scoped, tag = 'internal scratch']
  %s0 = inlined_call_operand.vmem [shape: f32[2,32,128], index: 0, kind: input, shape index: {}]
  %s1 = inlined_call_operand.vmem [shape: f32[32,1], index: 1, kind: input, shape index: {}]
  %s2 = inlined_call_operand.vmem [shape: f32[32,1], index: 2, kind: input, shape index: {}]
  %s3 = inlined_call_operand.vmem [shape: f32[2,128,32], index: 3, kind: output, shape index: {}]
  %s4 = sld [smem:[#allocation0]]
  $region45: #{act_drop_norm_cnn1d.1} parent=0
    _
  %s6 = ssub.s32 1, %s4
  %s7 = scalar_select 0, %s6, %s4
  loop: start=0, step=1, limit=4
  $region2: #{act_drop_norm_cnn1d.1} parent=0 // loop_pre_header
    _
  $region3: #{act_drop_norm_cnn1d.1} parent=0 // loop_header
    %s9 = sphi 0, %s13
    %p10 = scmp.ge.s32.totalorder %s9, 4
    %s16 = sphi 0, %s28
    %s17 = sphi 0, %s24
    %s18 = sphi 0, %s16
    %s19 = sphi 0, %s17
    %s20 = sphi 0, %s18
    %s21 = sphi 0, %s19
    %s33 = sphi 0, %s35
    %s36 = sphi 0, %s33
    %s37 = sphi 0, %s36
    %s53 = sphi 0, %s37
    %s57 = sphi 0, %s57
    %s59 = sphi 0, %s57
    %s60 = sphi 0, %s59
    %s74 = sphi 0, %s60
    %s78 = sphi 0, %s78
    %s80 = sphi 0, %s78
    %s81 = sphi 0, %s80
    %s95 = sphi 0, %s81
    %s103 = sphi 0, %s105
    %s106 = sphi 0, %s103
    %s107 = sphi 0, %s106
    %s123 = sphi 0, %s107
  $region4: #{act_drop_norm_cnn1d.1} parent=0 // loop_header_branch
    %12 = sbr.rel (%p10) target = $region8
  $region5: #{act_drop_norm_cnn1d.1} parent=0 // loop_body
    %s14 = ssub.s32 %s9, 1
    %s15 = ssub.s32 %s9, 2
    %s22 = sadd.s32 1, %s17
    %p23 = scmp.ge.s32.totalorder %s22, 1
    %s24 = scalar_select %p23, 0, %s22
    %s25 = sadd.s32 1, %s16
    %s26 = scalar_select %p23, %s25, %s16
    %p27 = scmp.ge.s32.totalorder %s26, 2
    %s28 = scalar_select %p27, 0, %s26
    %s29 = ssub.s32 %s16, %s28
    %s30 = ssub.s32 %s17, %s24
    %s31 = sor.u32 %s29, %s30
    %p32 = scmp.eq.s32.totalorder %s31, 0
    %s34 = sadd.s32 %s33, 1
    %s35 = scalar_select %p32, %s33, %s34
    %p38 = pneg %p32
    %p39 = scmp.eq.s32.totalorder %s9, 1
    %p40 = por %p38, %p39
    %p41 = scmp.ne.s32.totalorder %s33, %s36
    %p42 = scmp.eq.s32.totalorder %s9, 0
    %p43 = por %p41, %p42
    %p44 = scmp.ne.s32.totalorder %s33, %s36
    %p45 = scmp.eq.s32.totalorder %s14, 1
    %p46 = por %p44, %p45
    %p47 = scmp.ne.s32.totalorder %s36, %s37
    %p48 = scmp.eq.s32.totalorder %s14, 0
    %p49 = por %p47, %p48
    %p50 = scmp.ne.s32.totalorder %s36, %s37
    %p51 = scmp.eq.s32.totalorder %s15, 1
    %p52 = por %p50, %p51
    %p54 = scmp.ne.s32.totalorder %s37, %s53
    %p55 = scmp.eq.s32.totalorder %s15, 0
    %p56 = por %p54, %p55
    %s58 = sadd.s32 %s57, 1
    %p61 = scmp.eq.s32.totalorder %s9, 1
    %p62 = scmp.ne.s32.totalorder %s57, %s59
    %p63 = scmp.eq.s32.totalorder %s9, 0
    %p64 = por %p62, %p63
    %p65 = scmp.ne.s32.totalorder %s57, %s59
    %p66 = scmp.eq.s32.totalorder %s14, 1
    %p67 = por %p65, %p66
    %p68 = scmp.ne.s32.totalorder %s59, %s60
    %p69 = scmp.eq.s32.totalorder %s14, 0
    %p70 = por %p68, %p69
    %p71 = scmp.ne.s32.totalorder %s59, %s60
    %p72 = scmp.eq.s32.totalorder %s15, 1
    %p73 = por %p71, %p72
    %p75 = scmp.ne.s32.totalorder %s60, %s74
    %p76 = scmp.eq.s32.totalorder %s15, 0
    %p77 = por %p75, %p76
    %s79 = sadd.s32 %s78, 1
    %p82 = scmp.eq.s32.totalorder %s9, 1
    %p83 = scmp.ne.s32.totalorder %s78, %s80
    %p84 = scmp.eq.s32.totalorder %s9, 0
    %p85 = por %p83, %p84
    %p86 = scmp.ne.s32.totalorder %s78, %s80
    %p87 = scmp.eq.s32.totalorder %s14, 1
    %p88 = por %p86, %p87
    %p89 = scmp.ne.s32.totalorder %s80, %s81
    %p90 = scmp.eq.s32.totalorder %s14, 0
    %p91 = por %p89, %p90
    %p92 = scmp.ne.s32.totalorder %s80, %s81
    %p93 = scmp.eq.s32.totalorder %s15, 1
    %p94 = por %p92, %p93
    %p96 = scmp.ne.s32.totalorder %s81, %s95
    %p97 = scmp.eq.s32.totalorder %s15, 0
    %p98 = por %p96, %p97
    %s99 = ssub.s32 %s16, %s28
    %s100 = ssub.s32 %s17, %s24
    %s101 = sor.u32 %s99, %s100
    %p102 = scmp.eq.s32.totalorder %s101, 0
    %s104 = sadd.s32 %s103, 1
    %s105 = scalar_select %p102, %s103, %s104
    %p108 = pneg %p102
    %p109 = scmp.eq.s32.totalorder %s9, 1
    %p110 = por %p108, %p109
    %p111 = scmp.ne.s32.totalorder %s103, %s106
    %p112 = scmp.eq.s32.totalorder %s9, 0
    %p113 = por %p111, %p112
    %p114 = scmp.ne.s32.totalorder %s103, %s106
    %p115 = scmp.eq.s32.totalorder %s14, 1
    %p116 = por %p114, %p115
    %p117 = scmp.ne.s32.totalorder %s106, %s107
    %p118 = scmp.eq.s32.totalorder %s14, 0
    %p119 = por %p117, %p118
    %p120 = scmp.ne.s32.totalorder %s106, %s107
    %p121 = scmp.eq.s32.totalorder %s15, 1
    %p122 = por %p120, %p121
    %p124 = scmp.ne.s32.totalorder %s107, %s123
    %p125 = scmp.eq.s32.totalorder %s15, 0
    %p126 = por %p124, %p125
    %p127 = scmp.le.s32.totalorder 1, %s9
    %p128 = scmp.lt.s32.totalorder %s9, 3
    %p129 = pnand %p127, %p128
    %p130 = pneg %p129
    // Predicated region
    $region9: #{act_drop_norm_cnn1d.1} parent=5 // pred_check
      _
    $region10: #{act_drop_norm_cnn1d.1} parent=5 // pred_check_branch
      %132 = sbr.rel (%p129) target = $region12
    $region11: #{act_drop_norm_cnn1d.1} parent=5 // pred_region
      %s133 = ssub.s32 %s9, 1
      // Predicated region
      $region13: #{act_drop_norm_cnn1d.1} parent=11 // pred_check
        %p134 = pneg %p70
      $region14: #{act_drop_norm_cnn1d.1} parent=11 // pred_check_branch
        %136 = sbr.rel (%p134) target = $region16
      $region15: #{act_drop_norm_cnn1d.1} parent=11 // pred_region
        _
      $region16: #{act_drop_norm_cnn1d.1} parent=11 // pred_fallthru
        _
      // Predicated region
      $region17: #{act_drop_norm_cnn1d.1} parent=11 // pred_check
        %p137 = pneg %p91
      $region18: #{act_drop_norm_cnn1d.1} parent=11 // pred_check_branch
        %139 = sbr.rel (%p137) target = $region20
      $region19: #{act_drop_norm_cnn1d.1} parent=11 // pred_region
        _
      $region20: #{act_drop_norm_cnn1d.1} parent=11 // pred_fallthru
        _
    $region12: #{act_drop_norm_cnn1d.1} parent=5 // pred_fallthru
      _
    %p140 = scmp.lt.s32.totalorder %s9, 2
    // Predicated region
    $region21: #{act_drop_norm_cnn1d.1} parent=5 // pred_check
      %p141 = pneg %p140
    $region22: #{act_drop_norm_cnn1d.1} parent=5 // pred_check_branch
      %143 = sbr.rel (%p141) target = $region24
    $region23: #{act_drop_norm_cnn1d.1} parent=5 // pred_region
      // Predicated region
      $region25: #{act_drop_norm_cnn1d.1} parent=23 // pred_check
        %p144 = pneg %p43
      $region26: #{act_drop_norm_cnn1d.1} parent=23 // pred_check_branch
        %146 = sbr.rel (%p144) target = $region28
      $region27: #{act_drop_norm_cnn1d.1} parent=23 // pred_region
        %p147 = scmp.lt.s32.totalorder %s16, 1
        %s148 = scalar_select %p147, %s16, 1
        %p149 = scmp.lt.s32.totalorder %s17, 0
        %s150 = scalar_select %p149, %s17, 0
        %s151 = smul.addr %s148, 4
        %s152 = sadd.s32 %s150, %s151
        %s153 = smul.addr %s152, 8
        %s154 = scalar_lea.vmem %s0, %s153
      $region28: #{act_drop_norm_cnn1d.1} parent=23 // pred_fallthru
        _
    $region24: #{act_drop_norm_cnn1d.1} parent=5 // pred_fallthru
      _
    %p155 = scmp.le.s32.totalorder 1, %s9
    %p156 = scmp.lt.s32.totalorder %s9, 3
    %p157 = pnand %p155, %p156
    %p158 = pneg %p157
    // Predicated region
    $region29: #{act_drop_norm_cnn1d.1} parent=5 // pred_check
      _
    $region30: #{act_drop_norm_cnn1d.1} parent=5 // pred_check_branch
      %160 = sbr.rel (%p157) target = $region32
    $region31: #{act_drop_norm_cnn1d.1} parent=5 // pred_region
      %s161 = ssub.s32 %s9, 1
      %p162 = scmp.lt.s32.totalorder %s18, 1
      %s163 = scalar_select %p162, %s18, 1
      %p164 = scmp.lt.s32.totalorder %s19, 0
      %s165 = scalar_select %p164, %s19, 0
      %s166 = smul.addr %s163, 4
      %s167 = sadd.s32 %s165, %s166
      %s168 = smul.addr %s167, 8
      %s169 = scalar_lea.vmem %s0, %s168
      %p170 = pneg %p49
      %p171 = pneg %p46
      %p172 = pneg %p70
      %p173 = pneg %p67
      %p174 = pneg %p91
      %p175 = pneg %p88
      %p176 = pneg %p119
      %p177 = pneg %p116
      %s178 = smul.u32 16, %s19
      %p179 = scmp.lt.s32.totalorder %s18, 1
      %s180 = scalar_select %p179, %s18, 1
      %p181 = scmp.lt.s32.totalorder %s178, 15
      %s182 = scalar_select %p181, %s178, 15
      %s183 = smul.addr %s180, 16
      %s184 = sadd.s32 %s182, %s183
      %s185 = smul.addr %s184, 8
      %s186 = scalar_lea.vmem %s3, %s185
      %p187 = scmp.lt.s32.totalorder %s18, 1
      %s188 = scalar_select %p187, %s18, 1
      %p189 = scmp.lt.s32.totalorder %s19, 0
      %s190 = scalar_select %p189, %s19, 0
      %s191 = smul.addr %s188, 4
      %s192 = sadd.s32 %s190, %s191
      %s193 = smul.addr %s192, 8
      %s194 = scalar_lea.vmem %s0, %s193
      %s195 = smul.u32 16, %s19
      %p196 = scmp.lt.s32.totalorder %s18, 1
      %s197 = scalar_select %p196, %s18, 1
      %p198 = scmp.lt.s32.totalorder %s195, 15
      %s199 = scalar_select %p198, %s195, 15
      %s200 = smul.addr %s197, 16
      %s201 = sadd.s32 %s199, %s200
      %s202 = smul.addr %s201, 8
      %s203 = scalar_lea.vmem %s3, %s202
      %s204 = smul.u32 16, %s19
      %v205 = vld [vmem:[%s194] sm:$0xff]
      %v206 = vld [vmem:[%s194 + $0x8] sm:$0xff]
      %v207 = vld [vmem:[%s194 + $0x10] sm:$0xff]
      %v208 = vld [vmem:[%s194 + $0x18] sm:$0xff]
      %v209 = vadd.f32 %v205, %v206
      %v210 = vadd.f32 %v209, %v207
      %v211 = vadd.f32 %v210, %v208
      %v212 = vrot.slane %v211, 4
      %v213 = vadd.f32 %v211, %v212
      %v214 = vrot.slane %v213, 2
      %v215 = vadd.f32 %v213, %v214
      %v216 = vrot.slane %v215, 1
      %v217 = vadd.f32 %v215, %v216
      %v218 = vmul.f32 %v205, %v205
      %v219 = vmul.f32 %v206, %v206
      %v220 = vmul.f32 %v207, %v207
      %v221 = vmul.f32 %v208, %v208
      %v222 = vadd.f32 %v218, %v219
      %v223 = vadd.f32 %v222, %v220
      %v224 = vadd.f32 %v223, %v221
      %v225 = vrot.slane %v224, 4
      %v226 = vadd.f32 %v224, %v225
      %v227 = vrot.slane %v226, 2
      %v228 = vadd.f32 %v226, %v227
      %v229 = vrot.slane %v228, 1
      %v230 = vadd.f32 %v228, %v229
      %v231 = vmul.f32 %v217, 0.03125
      %v232 = vmul.f32 %v230, 0.03125
      %v233 = vmul.f32 %v231, %v231
      %v234 = vsub.f32 %v232, %v233
      %v235 = vmax.f32 %v234, 0.0
      %v236 = vsub.f32 %v205, %v231
      %v237 = vsub.f32 %v206, %v231
      %v238 = vsub.f32 %v207, %v231
      %v239 = vsub.f32 %v208, %v231
      %v240 = vadd.f32 %v235, 1e-05
      %v241 = vrsqrt.pop %v240
      %v242 = vmul.f32 %v236, %v241
      %v243 = vmul.f32 %v237, %v241
      %v244 = vmul.f32 %v238, %v241
      %v245 = vmul.f32 %v239, %v241
      %v246 = vld [vmem:[%s1] sm:$0xff]
      %v247 = vld [vmem:[%s1 + $0x8] sm:$0xff]
      %v248 = vld [vmem:[%s1 + $0x10] sm:$0xff]
      %v249 = vld [vmem:[%s1 + $0x18] sm:$0xff]
      %251 = vset.pattern.permute.xlu0 0
      %252 = vperm.xlu0 %251, %v246
      %v253 = vpop.permute.xlu0 %252
      %256 = vset.pattern.permute.xlu0 0
      %257 = vperm.xlu0 %256, %v247
      %v258 = vpop.permute.xlu0 %257
      %261 = vset.pattern.permute.xlu0 0
      %262 = vperm.xlu0 %261, %v248
      %v263 = vpop.permute.xlu0 %262
      %266 = vset.pattern.permute.xlu0 0
      %267 = vperm.xlu0 %266, %v249
      %v268 = vpop.permute.xlu0 %267
      %v270 = vmul.f32 %v242, %v253
      %v271 = vmul.f32 %v243, %v258
      %v272 = vmul.f32 %v244, %v263
      %v273 = vmul.f32 %v245, %v268
      %v274 = vld [vmem:[%s2] sm:$0xff]
      %v275 = vld [vmem:[%s2 + $0x8] sm:$0xff]
      %v276 = vld [vmem:[%s2 + $0x10] sm:$0xff]
      %v277 = vld [vmem:[%s2 + $0x18] sm:$0xff]
      %279 = vset.pattern.permute.xlu0 0
      %280 = vperm.xlu0 %279, %v274
      %v281 = vpop.permute.xlu0 %280
      %284 = vset.pattern.permute.xlu0 0
      %285 = vperm.xlu0 %284, %v275
      %v286 = vpop.permute.xlu0 %285
      %289 = vset.pattern.permute.xlu0 0
      %290 = vperm.xlu0 %289, %v276
      %v291 = vpop.permute.xlu0 %290
      %294 = vset.pattern.permute.xlu0 0
      %295 = vperm.xlu0 %294, %v277
      %v296 = vpop.permute.xlu0 %295
      %v298 = vadd.f32 %v270, %v281
      %v299 = vadd.f32 %v271, %v286
      %v300 = vadd.f32 %v272, %v291
      %v301 = vadd.f32 %v273, %v296
      %v302 = vmul.f32 %v298, 0.5
      %v303 = vmul.f32 %v299, 0.5
      %v304 = vmul.f32 %v300, 0.5
      %v305 = vmul.f32 %v301, 0.5
      %v306 = vmul.f32 %v298, 0.70710677
      %v307 = vmul.f32 %v299, 0.70710677
      %v308 = vmul.f32 %v300, 0.70710677
      %v309 = vmul.f32 %v301, 0.70710677
      %v310 = verf.f32.pop %v306
      %v311 = verf.f32.pop %v307
      %v312 = verf.f32.pop %v308
      %v313 = verf.f32.pop %v309
      %v314 = vadd.f32 %v310, 1.0
      %v315 = vadd.f32 %v311, 1.0
      %v316 = vadd.f32 %v312, 1.0
      %v317 = vadd.f32 %v313, 1.0
      %v318 = vmul.f32 %v302, %v314
      %v319 = vmul.f32 %v303, %v315
      %v320 = vmul.f32 %v304, %v316
      %v321 = vmul.f32 %v305, %v317
      %322 = vxpose.xlu0.b32.start [1/16] %v318, 128
      %323 = vxpose.xlu0.b32.cont [2/16] %v319, 128
      %324 = vxpose.xlu0.b32.cont [3/16] %v320, 128
      %325 = vxpose.xlu0.b32.cont [4/16] %v321, 128
      %326 = vxpose.xlu0.b32.cont [5/16] 0.0, 128
      %327 = vxpose.xlu0.b32.cont [6/16] 0.0, 128
      %328 = vxpose.xlu0.b32.cont [7/16] 0.0, 128
      %329 = vxpose.xlu0.b32.cont [8/16] 0.0, 128
      %330 = vxpose.xlu0.b32.cont [9/16] 0.0, 128
      %331 = vxpose.xlu0.b32.cont [10/16] 0.0, 128
      %332 = vxpose.xlu0.b32.cont [11/16] 0.0, 128
      %333 = vxpose.xlu0.b32.cont [12/16] 0.0, 128
      %334 = vxpose.xlu0.b32.cont [13/16] 0.0, 128
      %335 = vxpose.xlu0.b32.cont [14/16] 0.0, 128
      %336 = vxpose.xlu0.b32.cont [15/16] 0.0, 128
      %337 = vxpose.xlu0.b32.end [16/16] 0.0, 128
      %v338 = vpop.trf.xlu0
      %v339 = vpop.trf.xlu0
      %v340 = vpop.trf.xlu0
      %v341 = vpop.trf.xlu0
      %v342 = vpop.trf.xlu0
      %v343 = vpop.trf.xlu0
      %v344 = vpop.trf.xlu0
      %v345 = vpop.trf.xlu0
      %v346 = vpop.trf.xlu0
      %v347 = vpop.trf.xlu0
      %v348 = vpop.trf.xlu0
      %v349 = vpop.trf.xlu0
      %v350 = vpop.trf.xlu0
      %v351 = vpop.trf.xlu0
      %v352 = vpop.trf.xlu0
      %v353 = vpop.trf.xlu0
      %vm354 = vcmask 261120
      %355 = vst.msk [vmem:[%s203] sm:$0xff] %vm354, %v338
      %356 = vst.msk [vmem:[%s203 + $0x8] sm:$0xff] %vm354, %v339
      %357 = vst.msk [vmem:[%s203 + $0x10] sm:$0xff] %vm354, %v340
      %358 = vst.msk [vmem:[%s203 + $0x18] sm:$0xff] %vm354, %v341
      %359 = vst.msk [vmem:[%s203 + $0x20] sm:$0xff] %vm354, %v342
      %360 = vst.msk [vmem:[%s203 + $0x28] sm:$0xff] %vm354, %v343
      %361 = vst.msk [vmem:[%s203 + $0x30] sm:$0xff] %vm354, %v344
      %362 = vst.msk [vmem:[%s203 + $0x38] sm:$0xff] %vm354, %v345
      %363 = vst.msk [vmem:[%s203 + $0x40] sm:$0xff] %vm354, %v346
      %364 = vst.msk [vmem:[%s203 + $0x48] sm:$0xff] %vm354, %v347
      %365 = vst.msk [vmem:[%s203 + $0x50] sm:$0xff] %vm354, %v348
      %366 = vst.msk [vmem:[%s203 + $0x58] sm:$0xff] %vm354, %v349
      %367 = vst.msk [vmem:[%s203 + $0x60] sm:$0xff] %vm354, %v350
      %368 = vst.msk [vmem:[%s203 + $0x68] sm:$0xff] %vm354, %v351
      %369 = vst.msk [vmem:[%s203 + $0x70] sm:$0xff] %vm354, %v352
      %370 = vst.msk [vmem:[%s203 + $0x78] sm:$0xff] %vm354, %v353
      %s371 = smul.u32 16, %s19
      %p372 = scmp.lt.s32.totalorder %s18, 1
      %s373 = scalar_select %p372, %s18, 1
      %p374 = scmp.lt.s32.totalorder %s371, 15
      %s375 = scalar_select %p374, %s371, 15
      %s376 = smul.addr %s373, 16
      %s377 = sadd.s32 %s375, %s376
      %s378 = smul.addr %s377, 8
      %s379 = scalar_lea.vmem %s3, %s378
      // Predicated region
      $region33: #{act_drop_norm_cnn1d.1} parent=31 // pred_check
        %p380 = pneg %p116
      $region34: #{act_drop_norm_cnn1d.1} parent=31 // pred_check_branch
        %382 = sbr.rel (%p380) target = $region36
      $region35: #{act_drop_norm_cnn1d.1} parent=31 // pred_region
        %s383 = smul.u32 16, %s19
      $region36: #{act_drop_norm_cnn1d.1} parent=31 // pred_fallthru
        _
    $region32: #{act_drop_norm_cnn1d.1} parent=5 // pred_fallthru
      _
    %p384 = scmp.le.s32.totalorder 2, %s9
    // Predicated region
    $region37: #{act_drop_norm_cnn1d.1} parent=5 // pred_check
      %p385 = pneg %p384
    $region38: #{act_drop_norm_cnn1d.1} parent=5 // pred_check_branch
      %387 = sbr.rel (%p385) target = $region40
    $region39: #{act_drop_norm_cnn1d.1} parent=5 // pred_region
      %s388 = ssub.s32 %s9, 2
      // Predicated region
      $region41: #{act_drop_norm_cnn1d.1} parent=39 // pred_check
        %p389 = pneg %p122
      $region42: #{act_drop_norm_cnn1d.1} parent=39 // pred_check_branch
        %391 = sbr.rel (%p389) target = $region44
      $region43: #{act_drop_norm_cnn1d.1} parent=39 // pred_region
        %s392 = smul.u32 16, %s21
        %p393 = scmp.lt.s32.totalorder %s20, 1
        %s394 = scalar_select %p393, %s20, 1
        %p395 = scmp.lt.s32.totalorder %s392, 15
        %s396 = scalar_select %p395, %s392, 15
        %s397 = smul.addr %s394, 16
        %s398 = sadd.s32 %s396, %s397
        %s399 = smul.addr %s398, 8
        %s400 = scalar_lea.vmem %s3, %s399
      $region44: #{act_drop_norm_cnn1d.1} parent=39 // pred_fallthru
        _
    $region40: #{act_drop_norm_cnn1d.1} parent=5 // pred_fallthru
      _
  $region6: #{act_drop_norm_cnn1d.1} parent=0 // loop_footer
    %s13 = sadd.s32 1, %s9
  $region7: #{act_drop_norm_cnn1d.1} parent=0 // loop_footer_branch
    %8 = sbr.rel target = $region3
  $region8: #{act_drop_norm_cnn1d.1} parent=0 // loop_exit
    _

</llo_original>
